<compile_context>
chip_gen: v5e
topology: v5e:2x2
jax: 0.10.0
libtpu: 0.0.40
codegen_flags: <defaults>
</compile_context>

<pallas_src>
import numpy as np
import jax
import jax.numpy as jnp
from jax.experimental import pallas as pl
from jax.experimental.pallas import tpu as pltpu


def _dot(a, b):
    return jnp.dot(a, b, preferred_element_type=jnp.float32)


# ---- complex matmuls with a real (Fr, Fi) constant operand, Gauss 3-mult trick ----

def _cmm_rF(ar, ai, Fr, Fi, Fsum):
    # (ar + i*ai) @ (Fr + i*Fi)          Fsum = Fr + Fi
    p1 = _dot(ar, Fr)
    p2 = _dot(ai, Fi)
    p3 = _dot(ar + ai, Fsum)
    return p1 - p2, p3 - p1 - p2


def _cmm_rFc(ar, ai, Fr, Fi, Fdif):
    # (ar + i*ai) @ conj(Fr + i*Fi)      Fdif = Fr - Fi
    p1 = _dot(ar, Fr)
    p2 = _dot(ai, Fi)
    p3 = _dot(ar + ai, Fdif)
    return p1 + p2, p3 - p1 + p2


def _cmm_lF(Fr, Fi, Fsum, ar, ai):
    # (Fr + i*Fi) @ (ar + i*ai)
    p1 = _dot(Fr, ar)
    p2 = _dot(Fi, ai)
    p3 = _dot(Fsum, ar + ai)
    return p1 - p2, p3 - p1 - p2


def _cmm_lFc(Fr, Fi, Fdif, ar, ai):
    # conj(Fr + i*Fi) @ (ar + i*ai)
    p1 = _dot(Fr, ar)
    p2 = _dot(Fi, ai)
    p3 = _dot(Fdif, ar + ai)
    return p1 + p2, p3 - p1 + p2


def diffractive_kernel(fr_ref, fi_ref, mr_ref, mi_ref, Fr_ref, Fi_ref,
                       Hr_ref, Hi_ref, or_ref, oi_ref,
                       wide_r, wide_i, tall_r, tall_i):
    Fr = Fr_ref[...]
    Fi = Fi_ref[...]
    Fsum = Fr + Fi          # hoisted once: shared RHS/LHS helper operands
    Fdif = Fr - Fi
    n = Fr.shape[0]
    m = fr_ref.shape[0]
    bt = m // n             # batch planes per block (static)

    # --- PhaseMask: field * exp(i*phase)  (tall layout) ---
    fr = fr_ref[...]
    fi = fi_ref[...]
    mr = mr_ref[...]
    mi = mi_ref[...]
    xr = fr * mr - fi * mi
    xi = fr * mi + fi * mr

    # --- fft2, row DFT (tall): A = X @ F  -> one (bt*N, N) @ (N, N) matmul chain ---
    ar, ai = _cmm_rF(xr, xi, Fr, Fi, Fsum)

    # --- re-layout tall -> wide (block copies, no transpose) ---
    if bt == 1:
        awr, awi = ar, ai
    else:
        for b in range(bt):
            wide_r[:, b * n:(b + 1) * n] = ar[b * n:(b + 1) * n, :]
            wide_i[:, b * n:(b + 1) * n] = ai[b * n:(b + 1) * n, :]
        awr = wide_r[...]
        awi = wide_i[...]

    # --- fft2, column DFT (wide): Y = F @ A  -> lane-dense (N, bt*N) result ---
    ywr, ywi = _cmm_lF(Fr, Fi, Fsum, awr, awi)

    # --- angular-spectrum transfer function (1/N^2 of the ifft2 already folded in) ---
    Hr = Hr_ref[...]
    Hi = Hi_ref[...]
    zwr = ywr * Hr - ywi * Hi
    zwi = ywr * Hi + ywi * Hr

    # --- ifft2, column DFT (wide): U = conj(F) @ Z ---
    uwr, uwi = _cmm_lFc(Fr, Fi, Fdif, zwr, zwi)

    # --- re-layout wide -> tall ---
    if bt == 1:
        ur, ui = uwr, uwi
    else:
        for b in range(bt):
            tall_r[b * n:(b + 1) * n, :] = uwr[:, b * n:(b + 1) * n]
            tall_i[b * n:(b + 1) * n, :] = uwi[:, b * n:(b + 1) * n]
        ur = tall_r[...]
        ui = tall_i[...]

    # --- ifft2, row DFT (tall): W = U @ conj(F) ---
    wr, wi = _cmm_rFc(ur, ui, Fr, Fi, Fdif)

    # TODO(synk): the PyTorch forward's `if torch.isnan(output).any(): raise` has no
    # in-kernel equivalent; do a host-side jnp.isnan check on the result if needed.
    or_ref[...] = wr
    oi_ref[...] = wi


def pick_batch_tile(B, N, target_rows=256, max_bt=8):
    """Largest divisor of B (capped) whose tall block has <= target_rows MXU rows."""
    divisors = [d for d in range(1, min(B, max_bt) + 1) if B % d == 0]
    fits = [d for d in divisors if d * N <= max(target_rows, N)]
    bt = max(fits) if fits else 1
    # Prefer leaving >= 2 grid steps (feeds both v7x TensorCores) when a smaller
    # tile still keeps >= 128 rows per matmul.
    if bt == B and B > 1:
        smaller = [d for d in fits if d < B and d * N >= 128]
        if smaller:
            bt = max(smaller)
    return bt


def diffractive_layer(field_r, field_i, mask_tall_r, mask_tall_i,
                      F_r, F_i, H_wide_r, H_wide_i, bt):
    B, N, _ = field_r.shape
    assert B % bt == 0
    M = bt * N

    # Stack planes along rows: (B, N, N) -> (B*N, N); a free host-side reshape.
    fr2 = field_r.reshape(B * N, N)
    fi2 = field_i.reshape(B * N, N)

    tall_blk = pl.BlockSpec((M, N), lambda g: (g, 0))     # per-step batch block
    mask_blk = pl.BlockSpec((M, N), lambda g: (0, 0))     # grid-invariant constants
    f_blk = pl.BlockSpec((N, N), lambda g: (0, 0))
    h_blk = pl.BlockSpec((N, M), lambda g: (0, 0))

    out_r2, out_i2 = pl.pallas_call(
        diffractive_kernel,
        out_shape=(jax.ShapeDtypeStruct((B * N, N), jnp.float32),
                   jax.ShapeDtypeStruct((B * N, N), jnp.float32)),
        grid=(B // bt,),
        in_specs=[tall_blk, tall_blk, mask_blk, mask_blk,
                  f_blk, f_blk, h_blk, h_blk],
        out_specs=(tall_blk, tall_blk),
        scratch_shapes=[pltpu.VMEM((N, M), jnp.float32),
                        pltpu.VMEM((N, M), jnp.float32),
                        pltpu.VMEM((M, N), jnp.float32),
                        pltpu.VMEM((M, N), jnp.float32)],
        compiler_params=pltpu.CompilerParams(dimension_semantics=("parallel",)),
    )(fr2, fi2, mask_tall_r, mask_tall_i, F_r, F_i, H_wide_r, H_wide_i)

    return out_r2.reshape(B, N, N), out_i2.reshape(B, N, N)


def build_constants(N, bt, wavelength, pixel_size, distance, key):
    # PhaseMask parameter: uniform(0, 2*pi), deterministic init
    phase = jax.random.uniform(key, (N, N), dtype=jnp.float32,
                               minval=0.0, maxval=2.0 * np.pi)
    mask = np.exp(1j * np.asarray(phase, dtype=np.float64)).astype(np.complex64)

    # Angular-spectrum transfer function H (same math as the PyTorch __init__,
    # including zeroing kz for evanescent components).
    k = 2.0 * np.pi / wavelength
    fx = np.fft.fftfreq(N, d=pixel_size)
    FX, FY = np.meshgrid(fx, fx, indexing='ij')
    kx = 2.0 * np.pi * FX
    ky = 2.0 * np.pi * FY
    kz = np.sqrt((k ** 2 - kx ** 2 - ky ** 2).astype(np.complex128))
    kz = np.where(kz.imag == 0, kz, 0.0 + 0.0j)
    H = np.exp(1j * kz * distance).astype(np.complex64)

    # Symmetric DFT matrix F: fft2(X) = F @ X @ F ; ifft2 reuses conj(F) in-kernel.
    n = np.arange(N)
    F = np.exp(-2j * np.pi * np.outer(n, n) / N).astype(np.complex64)

    # Fold the ifft2 1/N^2 normalization into H, and pre-tile the per-plane
    # constants into the block layouts used by the kernel.
    H_scaled = (H / (N * N)).astype(np.complex64)
    mask_tall = np.tile(mask, (bt, 1))        # (bt*N, N)  planes stacked along rows
    H_wide = np.tile(H_scaled, (1, bt))       # (N, bt*N)  planes side-by-side in lanes

    to32 = lambda a: jnp.asarray(a, dtype=jnp.float32)
    return (to32(mask_tall.real), to32(mask_tall.imag),
            to32(F.real), to32(F.imag),
            to32(H_wide.real), to32(H_wide.imag),
            jnp.asarray(mask), jnp.asarray(H))


if __name__ == "__main__":
    B, N = 2, 16
    wavelength = 500e-9
    pixel_size = 1e-6
    distance = 1e-3

    key = jax.random.PRNGKey(0)
    k_phase, k_fr, k_fi = jax.random.split(key, 3)

    bt = pick_batch_tile(B, N)

    (mask_tall_r, mask_tall_i, F_r, F_i, H_wide_r, H_wide_i,
     mask_c, H_c) = build_constants(N, bt, wavelength, pixel_size, distance, k_phase)

    field_r = jax.random.normal(k_fr, (B, N, N), dtype=jnp.float32)
    field_i = jax.random.normal(k_fi, (B, N, N), dtype=jnp.float32)

    out_r, out_i = diffractive_layer(field_r, field_i, mask_tall_r, mask_tall_i,
                                     F_r, F_i, H_wide_r, H_wide_i, bt)
    jax.block_until_ready((out_r, out_i))

    # Reference: same math with jnp complex FFTs
    field_c = field_r + 1j * field_i
    ref = jnp.fft.ifft2(jnp.fft.fft2(field_c * mask_c[None]) * H_c[None])
    got = out_r + 1j * out_i
    np.testing.assert_allclose(np.asarray(got), np.asarray(ref),
                               rtol=1e-3, atol=1e-3)

    print("KERNEL_OK")
</pallas_src>

<mosaic_0001>
module attributes {stable_mosaic.version = 11 : i64} {
  func.func @diffractive_kernel(%arg0: i32, %arg1: memref<32x16xf32, #tpu.memory_space<vmem>>, %arg2: memref<32x16xf32, #tpu.memory_space<vmem>>, %arg3: memref<32x16xf32, #tpu.memory_space<vmem>>, %arg4: memref<32x16xf32, #tpu.memory_space<vmem>>, %arg5: memref<16x16xf32, #tpu.memory_space<vmem>>, %arg6: memref<16x16xf32, #tpu.memory_space<vmem>>, %arg7: memref<16x32xf32, #tpu.memory_space<vmem>>, %arg8: memref<16x32xf32, #tpu.memory_space<vmem>>, %arg9: memref<32x16xf32, #tpu.memory_space<vmem>>, %arg10: memref<32x16xf32, #tpu.memory_space<vmem>>, %arg11: memref<16x32xf32, #tpu.memory_space<vmem>>, %arg12: memref<16x32xf32, #tpu.memory_space<vmem>>, %arg13: memref<32x16xf32, #tpu.memory_space<vmem>>, %arg14: memref<32x16xf32, #tpu.memory_space<vmem>>) attributes {dimension_semantics = [#tpu.dimension_semantics<parallel>], iteration_bounds = array<i64: 1>, scalar_prefetch = 0 : i64, scratch_operands = 4 : i64, tpu.core_type = #tpu.core_type<tc>, window_params = [{transform_indices = @transform_0, window_bounds = array<i64: 32, 16>}, {transform_indices = @transform_1, window_bounds = array<i64: 32, 16>}, {pipeline_mode = #tpu.pipeline_mode<synchronous>, transform_indices = @transform_2, window_bounds = array<i64: 32, 16>}, {pipeline_mode = #tpu.pipeline_mode<synchronous>, transform_indices = @transform_3, window_bounds = array<i64: 32, 16>}, {pipeline_mode = #tpu.pipeline_mode<synchronous>, transform_indices = @transform_4, window_bounds = array<i64: 16, 16>}, {pipeline_mode = #tpu.pipeline_mode<synchronous>, transform_indices = @transform_5, window_bounds = array<i64: 16, 16>}, {pipeline_mode = #tpu.pipeline_mode<synchronous>, transform_indices = @transform_6, window_bounds = array<i64: 16, 32>}, {pipeline_mode = #tpu.pipeline_mode<synchronous>, transform_indices = @transform_7, window_bounds = array<i64: 16, 32>}, {transform_indices = @transform_8, window_bounds = array<i64: 32, 16>}, {transform_indices = @transform_9, window_bounds = array<i64: 32, 16>}]} {
    %c0 = arith.constant 0 : index
    %c0_0 = arith.constant 0 : index
    %0 = vector.load %arg5[%c0, %c0_0] : memref<16x16xf32, #tpu.memory_space<vmem>>, vector<16x16xf32>
    %c0_1 = arith.constant 0 : index
    %c0_2 = arith.constant 0 : index
    %1 = vector.load %arg6[%c0_1, %c0_2] : memref<16x16xf32, #tpu.memory_space<vmem>>, vector<16x16xf32>
    %2 = arith.addf %0, %1 : vector<16x16xf32>
    %3 = arith.subf %0, %1 : vector<16x16xf32>
    %c0_3 = arith.constant 0 : index
    %c0_4 = arith.constant 0 : index
    %4 = vector.load %arg1[%c0_3, %c0_4] : memref<32x16xf32, #tpu.memory_space<vmem>>, vector<32x16xf32>
    %c0_5 = arith.constant 0 : index
    %c0_6 = arith.constant 0 : index
    %5 = vector.load %arg2[%c0_5, %c0_6] : memref<32x16xf32, #tpu.memory_space<vmem>>, vector<32x16xf32>
    %c0_7 = arith.constant 0 : index
    %c0_8 = arith.constant 0 : index
    %6 = vector.load %arg3[%c0_7, %c0_8] : memref<32x16xf32, #tpu.memory_space<vmem>>, vector<32x16xf32>
    %c0_9 = arith.constant 0 : index
    %c0_10 = arith.constant 0 : index
    %7 = vector.load %arg4[%c0_9, %c0_10] : memref<32x16xf32, #tpu.memory_space<vmem>>, vector<32x16xf32>
    %8 = arith.mulf %4, %6 : vector<32x16xf32>
    %9 = arith.mulf %5, %7 : vector<32x16xf32>
    %10 = arith.subf %8, %9 : vector<32x16xf32>
    %11 = arith.mulf %4, %7 : vector<32x16xf32>
    %12 = arith.mulf %5, %6 : vector<32x16xf32>
    %13 = arith.addf %11, %12 : vector<32x16xf32>
    %cst = arith.constant dense<0.000000e+00> : vector<32x16xf32>
    %14 = tpu.matmul %10, %0, %cst {dimension_numbers = #tpu.dot_dimension_numbers<[1], [0], [0], [1], [0, 0, 1, 1], [], []>} : vector<32x16xf32>, vector<16x16xf32>, vector<32x16xf32> -> vector<32x16xf32>
    %cst_11 = arith.constant dense<0.000000e+00> : vector<32x16xf32>
    %15 = tpu.matmul %13, %1, %cst_11 {dimension_numbers = #tpu.dot_dimension_numbers<[1], [0], [0], [1], [0, 0, 1, 1], [], []>} : vector<32x16xf32>, vector<16x16xf32>, vector<32x16xf32> -> vector<32x16xf32>
    %16 = arith.addf %10, %13 : vector<32x16xf32>
    %cst_12 = arith.constant dense<0.000000e+00> : vector<32x16xf32>
    %17 = tpu.matmul %16, %2, %cst_12 {dimension_numbers = #tpu.dot_dimension_numbers<[1], [0], [0], [1], [0, 0, 1, 1], [], []>} : vector<32x16xf32>, vector<16x16xf32>, vector<32x16xf32> -> vector<32x16xf32>
    %18 = arith.subf %14, %15 : vector<32x16xf32>
    %19 = arith.subf %17, %14 : vector<32x16xf32>
    %20 = arith.subf %19, %15 : vector<32x16xf32>
    %21 = vector.extract_strided_slice %18 {offsets = [0, 0], sizes = [16, 16], strides = [1, 1]} : vector<32x16xf32> to vector<16x16xf32>
    %c0_13 = arith.constant 0 : index
    %c0_14 = arith.constant 0 : index
    %22 = vector.load %arg11[%c0_13, %c0_14] : memref<16x32xf32, #tpu.memory_space<vmem>>, vector<16x16xf32>
    tpu.vector_store %arg11[%c0_13, %c0_14], %21 {strides = array<i32>} : memref<16x32xf32, #tpu.memory_space<vmem>>, vector<16x16xf32>,
    %23 = vector.extract_strided_slice %20 {offsets = [0, 0], sizes = [16, 16], strides = [1, 1]} : vector<32x16xf32> to vector<16x16xf32>
    %c0_15 = arith.constant 0 : index
    %c0_16 = arith.constant 0 : index
    %24 = vector.load %arg12[%c0_15, %c0_16] : memref<16x32xf32, #tpu.memory_space<vmem>>, vector<16x16xf32>
    tpu.vector_store %arg12[%c0_15, %c0_16], %23 {strides = array<i32>} : memref<16x32xf32, #tpu.memory_space<vmem>>, vector<16x16xf32>,
    %25 = vector.extract_strided_slice %18 {offsets = [16, 0], sizes = [16, 16], strides = [1, 1]} : vector<32x16xf32> to vector<16x16xf32>
    %c0_17 = arith.constant 0 : index
    %c16 = arith.constant 16 : index
    %26 = vector.load %arg11[%c0_17, %c16] : memref<16x32xf32, #tpu.memory_space<vmem>>, vector<16x16xf32>
    tpu.vector_store %arg11[%c0_17, %c16], %25 {strides = array<i32>} : memref<16x32xf32, #tpu.memory_space<vmem>>, vector<16x16xf32>,
    %27 = vector.extract_strided_slice %20 {offsets = [16, 0], sizes = [16, 16], strides = [1, 1]} : vector<32x16xf32> to vector<16x16xf32>
    %c0_18 = arith.constant 0 : index
    %c16_19 = arith.constant 16 : index
    %28 = vector.load %arg12[%c0_18, %c16_19] : memref<16x32xf32, #tpu.memory_space<vmem>>, vector<16x16xf32>
    tpu.vector_store %arg12[%c0_18, %c16_19], %27 {strides = array<i32>} : memref<16x32xf32, #tpu.memory_space<vmem>>, vector<16x16xf32>,
    %c0_20 = arith.constant 0 : index
    %c0_21 = arith.constant 0 : index
    %29 = vector.load %arg11[%c0_20, %c0_21] : memref<16x32xf32, #tpu.memory_space<vmem>>, vector<16x32xf32>
    %c0_22 = arith.constant 0 : index
    %c0_23 = arith.constant 0 : index
    %30 = vector.load %arg12[%c0_22, %c0_23] : memref<16x32xf32, #tpu.memory_space<vmem>>, vector<16x32xf32>
    %cst_24 = arith.constant dense<0.000000e+00> : vector<16x32xf32>
    %31 = tpu.matmul %0, %29, %cst_24 {dimension_numbers = #tpu.dot_dimension_numbers<[1], [0], [0], [1], [0, 0, 1, 1], [], []>} : vector<16x16xf32>, vector<16x32xf32>, vector<16x32xf32> -> vector<16x32xf32>
    %cst_25 = arith.constant dense<0.000000e+00> : vector<16x32xf32>
    %32 = tpu.matmul %1, %30, %cst_25 {dimension_numbers = #tpu.dot_dimension_numbers<[1], [0], [0], [1], [0, 0, 1, 1], [], []>} : vector<16x16xf32>, vector<16x32xf32>, vector<16x32xf32> -> vector<16x32xf32>
    %33 = arith.addf %29, %30 : vector<16x32xf32>
    %cst_26 = arith.constant dense<0.000000e+00> : vector<16x32xf32>
    %34 = tpu.matmul %2, %33, %cst_26 {dimension_numbers = #tpu.dot_dimension_numbers<[1], [0], [0], [1], [0, 0, 1, 1], [], []>} : vector<16x16xf32>, vector<16x32xf32>, vector<16x32xf32> -> vector<16x32xf32>
    %35 = arith.subf %31, %32 : vector<16x32xf32>
    %36 = arith.subf %34, %31 : vector<16x32xf32>
    %37 = arith.subf %36, %32 : vector<16x32xf32>
    %c0_27 = arith.constant 0 : index
    %c0_28 = arith.constant 0 : index
    %38 = vector.load %arg7[%c0_27, %c0_28] : memref<16x32xf32, #tpu.memory_space<vmem>>, vector<16x32xf32>
    %c0_29 = arith.constant 0 : index
    %c0_30 = arith.constant 0 : index
    %39 = vector.load %arg8[%c0_29, %c0_30] : memref<16x32xf32, #tpu.memory_space<vmem>>, vector<16x32xf32>
    %40 = arith.mulf %35, %38 : vector<16x32xf32>
    %41 = arith.mulf %37, %39 : vector<16x32xf32>
    %42 = arith.subf %40, %41 : vector<16x32xf32>
    %43 = arith.mulf %35, %39 : vector<16x32xf32>
    %44 = arith.mulf %37, %38 : vector<16x32xf32>
    %45 = arith.addf %43, %44 : vector<16x32xf32>
    %cst_31 = arith.constant dense<0.000000e+00> : vector<16x32xf32>
    %46 = tpu.matmul %0, %42, %cst_31 {dimension_numbers = #tpu.dot_dimension_numbers<[1], [0], [0], [1], [0, 0, 1, 1], [], []>} : vector<16x16xf32>, vector<16x32xf32>, vector<16x32xf32> -> vector<16x32xf32>
    %cst_32 = arith.constant dense<0.000000e+00> : vector<16x32xf32>
    %47 = tpu.matmul %1, %45, %cst_32 {dimension_numbers = #tpu.dot_dimension_numbers<[1], [0], [0], [1], [0, 0, 1, 1], [], []>} : vector<16x16xf32>, vector<16x32xf32>, vector<16x32xf32> -> vector<16x32xf32>
    %48 = arith.addf %42, %45 : vector<16x32xf32>
    %cst_33 = arith.constant dense<0.000000e+00> : vector<16x32xf32>
    %49 = tpu.matmul %3, %48, %cst_33 {dimension_numbers = #tpu.dot_dimension_numbers<[1], [0], [0], [1], [0, 0, 1, 1], [], []>} : vector<16x16xf32>, vector<16x32xf32>, vector<16x32xf32> -> vector<16x32xf32>
    %50 = arith.addf %46, %47 : vector<16x32xf32>
    %51 = arith.subf %49, %46 : vector<16x32xf32>
    %52 = arith.addf %51, %47 : vector<16x32xf32>
    %53 = vector.extract_strided_slice %50 {offsets = [0, 0], sizes = [16, 16], strides = [1, 1]} : vector<16x32xf32> to vector<16x16xf32>
    %c0_34 = arith.constant 0 : index
    %c0_35 = arith.constant 0 : index
    %54 = vector.load %arg13[%c0_34, %c0_35] : memref<32x16xf32, #tpu.memory_space<vmem>>, vector<16x16xf32>
    tpu.vector_store %arg13[%c0_34, %c0_35], %53 {strides = array<i32>} : memref<32x16xf32, #tpu.memory_space<vmem>>, vector<16x16xf32>,
    %55 = vector.extract_strided_slice %52 {offsets = [0, 0], sizes = [16, 16], strides = [1, 1]} : vector<16x32xf32> to vector<16x16xf32>
    %c0_36 = arith.constant 0 : index
    %c0_37 = arith.constant 0 : index
    %56 = vector.load %arg14[%c0_36, %c0_37] : memref<32x16xf32, #tpu.memory_space<vmem>>, vector<16x16xf32>
    tpu.vector_store %arg14[%c0_36, %c0_37], %55 {strides = array<i32>} : memref<32x16xf32, #tpu.memory_space<vmem>>, vector<16x16xf32>,
    %57 = vector.extract_strided_slice %50 {offsets = [0, 16], sizes = [16, 16], strides = [1, 1]} : vector<16x32xf32> to vector<16x16xf32>
    %c16_38 = arith.constant 16 : index
    %c0_39 = arith.constant 0 : index
    %58 = vector.load %arg13[%c16_38, %c0_39] : memref<32x16xf32, #tpu.memory_space<vmem>>, vector<16x16xf32>
    tpu.vector_store %arg13[%c16_38, %c0_39], %57 {strides = array<i32>} : memref<32x16xf32, #tpu.memory_space<vmem>>, vector<16x16xf32>,
    %59 = vector.extract_strided_slice %52 {offsets = [0, 16], sizes = [16, 16], strides = [1, 1]} : vector<16x32xf32> to vector<16x16xf32>
    %c16_40 = arith.constant 16 : index
    %c0_41 = arith.constant 0 : index
    %60 = vector.load %arg14[%c16_40, %c0_41] : memref<32x16xf32, #tpu.memory_space<vmem>>, vector<16x16xf32>
    tpu.vector_store %arg14[%c16_40, %c0_41], %59 {strides = array<i32>} : memref<32x16xf32, #tpu.memory_space<vmem>>, vector<16x16xf32>,
    %c0_42 = arith.constant 0 : index
    %c0_43 = arith.constant 0 : index
    %61 = vector.load %arg13[%c0_42, %c0_43] : memref<32x16xf32, #tpu.memory_space<vmem>>, vector<32x16xf32>
    %c0_44 = arith.constant 0 : index
    %c0_45 = arith.constant 0 : index
    %62 = vector.load %arg14[%c0_44, %c0_45] : memref<32x16xf32, #tpu.memory_space<vmem>>, vector<32x16xf32>
    %cst_46 = arith.constant dense<0.000000e+00> : vector<32x16xf32>
    %63 = tpu.matmul %61, %0, %cst_46 {dimension_numbers = #tpu.dot_dimension_numbers<[1], [0], [0], [1], [0, 0, 1, 1], [], []>} : vector<32x16xf32>, vector<16x16xf32>, vector<32x16xf32> -> vector<32x16xf32>
    %cst_47 = arith.constant dense<0.000000e+00> : vector<32x16xf32>
    %64 = tpu.matmul %62, %1, %cst_47 {dimension_numbers = #tpu.dot_dimension_numbers<[1], [0], [0], [1], [0, 0, 1, 1], [], []>} : vector<32x16xf32>, vector<16x16xf32>, vector<32x16xf32> -> vector<32x16xf32>
    %65 = arith.addf %61, %62 : vector<32x16xf32>
    %cst_48 = arith.constant dense<0.000000e+00> : vector<32x16xf32>
    %66 = tpu.matmul %65, %3, %cst_48 {dimension_numbers = #tpu.dot_dimension_numbers<[1], [0], [0], [1], [0, 0, 1, 1], [], []>} : vector<32x16xf32>, vector<16x16xf32>, vector<32x16xf32> -> vector<32x16xf32>
    %67 = arith.addf %63, %64 : vector<32x16xf32>
    %68 = arith.subf %66, %63 : vector<32x16xf32>
    %69 = arith.addf %68, %64 : vector<32x16xf32>
    %c0_49 = arith.constant 0 : index
    %c0_50 = arith.constant 0 : index
    %70 = vector.load %arg9[%c0_49, %c0_50] : memref<32x16xf32, #tpu.memory_space<vmem>>, vector<32x16xf32>
    tpu.vector_store %arg9[%c0_49, %c0_50], %67 {strides = array<i32>} : memref<32x16xf32, #tpu.memory_space<vmem>>, vector<32x16xf32>,
    %c0_51 = arith.constant 0 : index
    %c0_52 = arith.constant 0 : index
    %71 = vector.load %arg10[%c0_51, %c0_52] : memref<32x16xf32, #tpu.memory_space<vmem>>, vector<32x16xf32>
    tpu.vector_store %arg10[%c0_51, %c0_52], %69 {strides = array<i32>} : memref<32x16xf32, #tpu.memory_space<vmem>>, vector<32x16xf32>,
    return
  }
  func.func @transform_0(%arg0: i32) -> (i32, i32) {
    %c0_i32 = arith.constant 0 : i32
    %c0_i32_0 = arith.constant 0 : i32
    return %arg0, %c0_i32 : i32, i32
  }
  func.func @transform_1(%arg0: i32) -> (i32, i32) {
    %c0_i32 = arith.constant 0 : i32
    %c0_i32_0 = arith.constant 0 : i32
    return %arg0, %c0_i32 : i32, i32
  }
  func.func @transform_2(%arg0: i32) -> (i32, i32) {
    %c0_i32 = arith.constant 0 : i32
    %c0_i32_0 = arith.constant 0 : i32
    %c0_i32_1 = arith.constant 0 : i32
    return %c0_i32, %c0_i32_0 : i32, i32
  }
  func.func @transform_3(%arg0: i32) -> (i32, i32) {
    %c0_i32 = arith.constant 0 : i32
    %c0_i32_0 = arith.constant 0 : i32
    %c0_i32_1 = arith.constant 0 : i32
    return %c0_i32, %c0_i32_0 : i32, i32
  }
  func.func @transform_4(%arg0: i32) -> (i32, i32) {
    %c0_i32 = arith.constant 0 : i32
    %c0_i32_0 = arith.constant 0 : i32
    %c0_i32_1 = arith.constant 0 : i32
    return %c0_i32, %c0_i32_0 : i32, i32
  }
  func.func @transform_5(%arg0: i32) -> (i32, i32) {
    %c0_i32 = arith.constant 0 : i32
    %c0_i32_0 = arith.constant 0 : i32
    %c0_i32_1 = arith.constant 0 : i32
    return %c0_i32, %c0_i32_0 : i32, i32
  }
  func.func @transform_6(%arg0: i32) -> (i32, i32) {
    %c0_i32 = arith.constant 0 : i32
    %c0_i32_0 = arith.constant 0 : i32
    %c0_i32_1 = arith.constant 0 : i32
    return %c0_i32, %c0_i32_0 : i32, i32
  }
  func.func @transform_7(%arg0: i32) -> (i32, i32) {
    %c0_i32 = arith.constant 0 : i32
    %c0_i32_0 = arith.constant 0 : i32
    %c0_i32_1 = arith.constant 0 : i32
    return %c0_i32, %c0_i32_0 : i32, i32
  }
  func.func @transform_8(%arg0: i32) -> (i32, i32) {
    %c0_i32 = arith.constant 0 : i32
    %c0_i32_0 = arith.constant 0 : i32
    return %arg0, %c0_i32 : i32, i32
  }
  func.func @transform_9(%arg0: i32) -> (i32, i32) {
    %c0_i32 = arith.constant 0 : i32
    %c0_i32_0 = arith.constant 0 : i32
    return %arg0, %c0_i32 : i32, i32
  }
}

</mosaic_0001>

<llo_original>
// kernel: tpu_custom_call.1
$region0: #{tpu_custom_call.1}
  #allocation0 [shape = 'u32[]', space=smem, size = 0x4, offset = 0x4, fixed_abs, tag = 'smem constant byte address 0x4 - core index']
  #allocation1 [shape = 'u32[72,128]{1,0:T(1,128)}', space=vmem, size = 0x9000, scoped, tag = 'internal scratch']
  #allocation2 [shape = 'f32[16,32]{1,0:T(8,128)}', space=vmem, size = 0x2000, scoped, tag = 'scratch operand']
  #allocation3 [shape = 'f32[16,32]{1,0:T(8,128)}', space=vmem, size = 0x2000, scoped, tag = 'scratch operand']
  #allocation4 [shape = 'f32[32,16]{1,0:T(8,128)}', space=vmem, size = 0x4000, scoped, tag = 'scratch operand']
  #allocation5 [shape = 'f32[32,16]{1,0:T(8,128)}', space=vmem, size = 0x4000, scoped, tag = 'scratch operand']
  %s0 = inlined_call_operand.vmem [shape: f32[32,16], index: 0, kind: input, shape index: {}]
  %s1 = inlined_call_operand.vmem [shape: f32[32,16], index: 1, kind: input, shape index: {}]
  %s2 = inlined_call_operand.vmem [shape: f32[32,16], index: 2, kind: input, shape index: {}]
  %s3 = inlined_call_operand.vmem [shape: f32[32,16], index: 3, kind: input, shape index: {}]
  %s4 = inlined_call_operand.vmem [shape: f32[16,16], index: 4, kind: input, shape index: {}]
  %s5 = inlined_call_operand.vmem [shape: f32[16,16], index: 5, kind: input, shape index: {}]
  %s6 = inlined_call_operand.vmem [shape: f32[16,32], index: 6, kind: input, shape index: {}]
  %s7 = inlined_call_operand.vmem [shape: f32[16,32], index: 7, kind: input, shape index: {}]
  %s8 = inlined_call_operand.vmem [shape: f32[32,16], index: 8, kind: output, shape index: {0}]
  %s9 = inlined_call_operand.vmem [shape: f32[32,16], index: 9, kind: output, shape index: {1}]
  %10 = xla_tuple %s8, %s9
  %s11 = sld [smem:[#allocation0]]
  $region50: #{tpu_custom_call.1} parent=0
    _
  %s13 = ssub.s32 1, %s11
  %s14 = scalar_select 0, %s13, %s11
  // Predicated region
  $region2: #{tpu_custom_call.1} parent=0 // pred_check
    _
  $region3: #{tpu_custom_call.1} parent=0 // pred_check_branch
    %16 = sbr.rel (0) target = $region5
  $region4: #{tpu_custom_call.1} parent=0 // pred_region
    _
  $region5: #{tpu_custom_call.1} parent=0 // pred_fallthru
    _
  // Predicated region
  $region6: #{tpu_custom_call.1} parent=0 // pred_check
    _
  $region7: #{tpu_custom_call.1} parent=0 // pred_check_branch
    %18 = sbr.rel (0) target = $region9
  $region8: #{tpu_custom_call.1} parent=0 // pred_region
    _
  $region9: #{tpu_custom_call.1} parent=0 // pred_fallthru
    _
  // Predicated region
  $region10: #{tpu_custom_call.1} parent=0 // pred_check
    _
  $region11: #{tpu_custom_call.1} parent=0 // pred_check_branch
    %20 = sbr.rel (0) target = $region13
  $region12: #{tpu_custom_call.1} parent=0 // pred_region
    _
  $region13: #{tpu_custom_call.1} parent=0 // pred_fallthru
    _
  // Predicated region
  $region14: #{tpu_custom_call.1} parent=0 // pred_check
    _
  $region15: #{tpu_custom_call.1} parent=0 // pred_check_branch
    %22 = sbr.rel (0) target = $region17
  $region16: #{tpu_custom_call.1} parent=0 // pred_region
    _
  $region17: #{tpu_custom_call.1} parent=0 // pred_fallthru
    _
  // Predicated region
  $region18: #{tpu_custom_call.1} parent=0 // pred_check
    _
  $region19: #{tpu_custom_call.1} parent=0 // pred_check_branch
    %24 = sbr.rel (0) target = $region21
  $region20: #{tpu_custom_call.1} parent=0 // pred_region
    _
  $region21: #{tpu_custom_call.1} parent=0 // pred_fallthru
    _
  // Predicated region
  $region22: #{tpu_custom_call.1} parent=0 // pred_check
    _
  $region23: #{tpu_custom_call.1} parent=0 // pred_check_branch
    %26 = sbr.rel (0) target = $region25
  $region24: #{tpu_custom_call.1} parent=0 // pred_region
    _
  $region25: #{tpu_custom_call.1} parent=0 // pred_fallthru
    _
  // Predicated region
  $region26: #{tpu_custom_call.1} parent=0 // pred_check
    _
  $region27: #{tpu_custom_call.1} parent=0 // pred_check_branch
    %28 = sbr.rel (0) target = $region29
  $region28: #{tpu_custom_call.1} parent=0 // pred_region
    _
  $region29: #{tpu_custom_call.1} parent=0 // pred_fallthru
    _
  // Predicated region
  $region30: #{tpu_custom_call.1} parent=0 // pred_check
    _
  $region31: #{tpu_custom_call.1} parent=0 // pred_check_branch
    %30 = sbr.rel (0) target = $region33
  $region32: #{tpu_custom_call.1} parent=0 // pred_region
    _
  $region33: #{tpu_custom_call.1} parent=0 // pred_fallthru
    _
  %v31 = vld [vmem:[%s4] sm:$0xff]
  %v32 = vld [vmem:[%s4 + $0x8] sm:$0xff]
  %v33 = vld [vmem:[%s5] sm:$0xff]
  %v34 = vld [vmem:[%s5 + $0x8] sm:$0xff]
  %v35 = vadd.f32 %v31, %v33
  %v36 = vadd.f32 %v32, %v34
  %v37 = vsub.f32 %v31, %v33
  %v38 = vsub.f32 %v32, %v34
  %v39 = vld [vmem:[%s0] sm:$0xff]
  %v40 = vld [vmem:[%s0 + $0x8] sm:$0xff]
  %v41 = vld [vmem:[%s0 + $0x10] sm:$0xff]
  %v42 = vld [vmem:[%s0 + $0x18] sm:$0xff]
  %v43 = vld [vmem:[%s1] sm:$0xff]
  %v44 = vld [vmem:[%s1 + $0x8] sm:$0xff]
  %v45 = vld [vmem:[%s1 + $0x10] sm:$0xff]
  %v46 = vld [vmem:[%s1 + $0x18] sm:$0xff]
  %v47 = vld [vmem:[%s2] sm:$0xff]
  %v48 = vld [vmem:[%s2 + $0x8] sm:$0xff]
  %v49 = vld [vmem:[%s2 + $0x10] sm:$0xff]
  %v50 = vld [vmem:[%s2 + $0x18] sm:$0xff]
  %v51 = vld [vmem:[%s3] sm:$0xff]
  %v52 = vld [vmem:[%s3 + $0x8] sm:$0xff]
  %v53 = vld [vmem:[%s3 + $0x10] sm:$0xff]
  %v54 = vld [vmem:[%s3 + $0x18] sm:$0xff]
  %v55 = vmul.f32 %v39, %v47
  %v56 = vmul.f32 %v40, %v48
  %v57 = vmul.f32 %v41, %v49
  %v58 = vmul.f32 %v42, %v50
  %v59 = vmul.f32 %v43, %v51
  %v60 = vmul.f32 %v44, %v52
  %v61 = vmul.f32 %v45, %v53
  %v62 = vmul.f32 %v46, %v54
  %v63 = vsub.f32 %v55, %v59
  %v64 = vsub.f32 %v56, %v60
  %v65 = vsub.f32 %v57, %v61
  %v66 = vsub.f32 %v58, %v62
  %v67 = vmul.f32 %v39, %v51
  %v68 = vmul.f32 %v40, %v52
  %v69 = vmul.f32 %v41, %v53
  %v70 = vmul.f32 %v42, %v54
  %v71 = vmul.f32 %v43, %v47
  %v72 = vmul.f32 %v44, %v48
  %v73 = vmul.f32 %v45, %v49
  %v74 = vmul.f32 %v46, %v50
  %v75 = vadd.f32 %v67, %v71
  %v76 = vadd.f32 %v68, %v72
  %v77 = vadd.f32 %v69, %v73
  %v78 = vadd.f32 %v70, %v74
  %vm79 = vcmask 130048
  %v81 = vsel %vm79, %v63, 0
  %v84 = vsel %vm79, %v64, 0
  %v87 = vsel %vm79, %v65, 0
  %v90 = vsel %vm79, %v66, 0
  %92 = vmatpush.msra.mxu0 0.0
  %93 = vmatpush.msra.mxu0 0.0
  %94 = vmatpush.msra.mxu0 0.0
  %95 = vmatpush.msra.mxu0 0.0
  %96 = vmatpush.msra.mxu0 0.0
  %97 = vmatpush.msra.mxu0 0.0
  %98 = vmatpush.msra.mxu0 0.0
  %99 = vmatpush.msra.mxu0 0.0
  %100 = vmatpush.msra.mxu0 0.0
  %101 = vmatpush.msra.mxu0 0.0
  %102 = vmatpush.msra.mxu0 0.0
  %103 = vmatpush.msra.mxu0 0.0
  %104 = vmatpush.msra.mxu0 0.0
  %105 = vmatpush.msra.mxu0 0.0
  %106 = vmatpush.msra.mxu0 %v32
  %107 = vmatpush.msra.mxu0 %v31
  %108 = vmatmul.f32.gmra.mxu0 %v81
  %v109 = vpop.f32.mrf.mxu0
  %v110 = vadd.f32 0.0, %v109
  %111 = vmatmul.f32.gmra.mxu0 %v84
  %v112 = vpop.f32.mrf.mxu0
  %v113 = vadd.f32 0.0, %v112
  %114 = vmatmul.f32.gmra.mxu0 %v87
  %v115 = vpop.f32.mrf.mxu0
  %v116 = vadd.f32 0.0, %v115
  %117 = vmatmul.f32.gmra.mxu0 %v90
  %v118 = vpop.f32.mrf.mxu0
  %v119 = vadd.f32 0.0, %v118
  %120 = vdwg.mxu0
  %v122 = vsel %vm79, %v75, 0
  %v125 = vsel %vm79, %v76, 0
  %v128 = vsel %vm79, %v77, 0
  %v131 = vsel %vm79, %v78, 0
  %133 = vmatpush.msra.mxu0 0.0
  %134 = vmatpush.msra.mxu0 0.0
  %135 = vmatpush.msra.mxu0 0.0
  %136 = vmatpush.msra.mxu0 0.0
  %137 = vmatpush.msra.mxu0 0.0
  %138 = vmatpush.msra.mxu0 0.0
  %139 = vmatpush.msra.mxu0 0.0
  %140 = vmatpush.msra.mxu0 0.0
  %141 = vmatpush.msra.mxu0 0.0
  %142 = vmatpush.msra.mxu0 0.0
  %143 = vmatpush.msra.mxu0 0.0
  %144 = vmatpush.msra.mxu0 0.0
  %145 = vmatpush.msra.mxu0 0.0
  %146 = vmatpush.msra.mxu0 0.0
  %147 = vmatpush.msra.mxu0 %v34
  %148 = vmatpush.msra.mxu0 %v33
  %149 = vmatmul.f32.gmra.mxu0 %v122
  %v150 = vpop.f32.mrf.mxu0
  %v151 = vadd.f32 0.0, %v150
  %152 = vmatmul.f32.gmra.mxu0 %v125
  %v153 = vpop.f32.mrf.mxu0
  %v154 = vadd.f32 0.0, %v153
  %155 = vmatmul.f32.gmra.mxu0 %v128
  %v156 = vpop.f32.mrf.mxu0
  %v157 = vadd.f32 0.0, %v156
  %158 = vmatmul.f32.gmra.mxu0 %v131
  %v159 = vpop.f32.mrf.mxu0
  %v160 = vadd.f32 0.0, %v159
  %161 = vdwg.mxu0
  %v162 = vadd.f32 %v63, %v75
  %v163 = vadd.f32 %v64, %v76
  %v164 = vadd.f32 %v65, %v77
  %v165 = vadd.f32 %v66, %v78
  %v167 = vsel %vm79, %v162, 0
  %v170 = vsel %vm79, %v163, 0
  %v173 = vsel %vm79, %v164, 0
  %v176 = vsel %vm79, %v165, 0
  %178 = vmatpush.msra.mxu0 0.0
  %179 = vmatpush.msra.mxu0 0.0
  %180 = vmatpush.msra.mxu0 0.0
  %181 = vmatpush.msra.mxu0 0.0
  %182 = vmatpush.msra.mxu0 0.0
  %183 = vmatpush.msra.mxu0 0.0
  %184 = vmatpush.msra.mxu0 0.0
  %185 = vmatpush.msra.mxu0 0.0
  %186 = vmatpush.msra.mxu0 0.0
  %187 = vmatpush.msra.mxu0 0.0
  %188 = vmatpush.msra.mxu0 0.0
  %189 = vmatpush.msra.mxu0 0.0
  %190 = vmatpush.msra.mxu0 0.0
  %191 = vmatpush.msra.mxu0 0.0
  %192 = vmatpush.msra.mxu0 %v36
  %193 = vmatpush.msra.mxu0 %v35
  %194 = vmatmul.f32.gmra.mxu0 %v167
  %v195 = vpop.f32.mrf.mxu0
  %v196 = vadd.f32 0.0, %v195
  %197 = vmatmul.f32.gmra.mxu0 %v170
  %v198 = vpop.f32.mrf.mxu0
  %v199 = vadd.f32 0.0, %v198
  %200 = vmatmul.f32.gmra.mxu0 %v173
  %v201 = vpop.f32.mrf.mxu0
  %v202 = vadd.f32 0.0, %v201
  %203 = vmatmul.f32.gmra.mxu0 %v176
  %v204 = vpop.f32.mrf.mxu0
  %v205 = vadd.f32 0.0, %v204
  %206 = vdwg.mxu0
  %v207 = vsub.f32 %v110, %v151
  %v208 = vsub.f32 %v113, %v154
  %v209 = vsub.f32 %v116, %v157
  %v210 = vsub.f32 %v119, %v160
  %v211 = vsub.f32 %v196, %v110
  %v212 = vsub.f32 %v199, %v113
  %v213 = vsub.f32 %v202, %v116
  %v214 = vsub.f32 %v205, %v119
  %v215 = vsub.f32 %v211, %v151
  %v216 = vsub.f32 %v212, %v154
  %v217 = vsub.f32 %v213, %v157
  %v218 = vsub.f32 %v214, %v160
  %219 = vst.msk [vmem:[#allocation2] sm:$0xff] %vm79, %v207
  %220 = vst.msk [vmem:[#allocation2 + $0x8] sm:$0xff] %vm79, %v208
  %221 = vst.msk [vmem:[#allocation3] sm:$0xff] %vm79, %v215
  %222 = vst.msk [vmem:[#allocation3 + $0x8] sm:$0xff] %vm79, %v216
  %225 = vrot.lane.b32.xlu0 %v209, 16
  %v226 = vpop.permute.xlu0 %225
  %227 = vrot.lane.b32.xlu0 %v210, 16
  %v228 = vpop.permute.xlu0 %227
  %vm231 = vcmask 261248
  %232 = vst.msk [vmem:[#allocation2] sm:$0xff] %vm231, %v226
  %233 = vst.msk [vmem:[#allocation2 + $0x8] sm:$0xff] %vm231, %v228
  %236 = vrot.lane.b32.xlu0 %v217, 16
  %v237 = vpop.permute.xlu0 %236
  %238 = vrot.lane.b32.xlu0 %v218, 16
  %v239 = vpop.permute.xlu0 %238
  %242 = vst.msk [vmem:[#allocation3] sm:$0xff] %vm231, %v237
  %243 = vst.msk [vmem:[#allocation3 + $0x8] sm:$0xff] %vm231, %v239
  %v244 = vld [vmem:[#allocation2] sm:$0xff]
  %v245 = vld [vmem:[#allocation2 + $0x8] sm:$0xff]
  %v246 = vld [vmem:[#allocation3] sm:$0xff]
  %v247 = vld [vmem:[#allocation3 + $0x8] sm:$0xff]
  %v249 = vsel %vm79, %v31, 0
  %v252 = vsel %vm79, %v32, 0
  %254 = vmatpush.msra.mxu0 0.0
  %255 = vmatpush.msra.mxu0 0.0
  %256 = vmatpush.msra.mxu0 0.0
  %257 = vmatpush.msra.mxu0 0.0
  %258 = vmatpush.msra.mxu0 0.0
  %259 = vmatpush.msra.mxu0 0.0
  %260 = vmatpush.msra.mxu0 0.0
  %261 = vmatpush.msra.mxu0 0.0
  %262 = vmatpush.msra.mxu0 0.0
  %263 = vmatpush.msra.mxu0 0.0
  %264 = vmatpush.msra.mxu0 0.0
  %265 = vmatpush.msra.mxu0 0.0
  %266 = vmatpush.msra.mxu0 0.0
  %267 = vmatpush.msra.mxu0 0.0
  %268 = vmatpush.msra.mxu0 %v245
  %269 = vmatpush.msra.mxu0 %v244
  %270 = vmatmul.f32.gmra.mxu0 %v249
  %v271 = vpop.f32.mrf.mxu0
  %v272 = vadd.f32 0.0, %v271
  %273 = vmatmul.f32.gmra.mxu0 %v252
  %v274 = vpop.f32.mrf.mxu0
  %v275 = vadd.f32 0.0, %v274
  %276 = vdwg.mxu0
  %v278 = vsel %vm79, %v33, 0
  %v281 = vsel %vm79, %v34, 0
  %283 = vmatpush.msra.mxu0 0.0
  %284 = vmatpush.msra.mxu0 0.0
  %285 = vmatpush.msra.mxu0 0.0
  %286 = vmatpush.msra.mxu0 0.0
  %287 = vmatpush.msra.mxu0 0.0
  %288 = vmatpush.msra.mxu0 0.0
  %289 = vmatpush.msra.mxu0 0.0
  %290 = vmatpush.msra.mxu0 0.0
  %291 = vmatpush.msra.mxu0 0.0
  %292 = vmatpush.msra.mxu0 0.0
  %293 = vmatpush.msra.mxu0 0.0
  %294 = vmatpush.msra.mxu0 0.0
  %295 = vmatpush.msra.mxu0 0.0
  %296 = vmatpush.msra.mxu0 0.0
  %297 = vmatpush.msra.mxu0 %v247
  %298 = vmatpush.msra.mxu0 %v246
  %299 = vmatmul.f32.gmra.mxu0 %v278
  %v300 = vpop.f32.mrf.mxu0
  %v301 = vadd.f32 0.0, %v300
  %302 = vmatmul.f32.gmra.mxu0 %v281
  %v303 = vpop.f32.mrf.mxu0
  %v304 = vadd.f32 0.0, %v303
  %305 = vdwg.mxu0
  %v306 = vadd.f32 %v244, %v246
  %v307 = vadd.f32 %v245, %v247
  %v309 = vsel %vm79, %v35, 0
  %v312 = vsel %vm79, %v36, 0
  %314 = vmatpush.msra.mxu0 0.0
  %315 = vmatpush.msra.mxu0 0.0
  %316 = vmatpush.msra.mxu0 0.0
  %317 = vmatpush.msra.mxu0 0.0
  %318 = vmatpush.msra.mxu0 0.0
  %319 = vmatpush.msra.mxu0 0.0
  %320 = vmatpush.msra.mxu0 0.0
  %321 = vmatpush.msra.mxu0 0.0
  %322 = vmatpush.msra.mxu0 0.0
  %323 = vmatpush.msra.mxu0 0.0
  %324 = vmatpush.msra.mxu0 0.0
  %325 = vmatpush.msra.mxu0 0.0
  %326 = vmatpush.msra.mxu0 0.0
  %327 = vmatpush.msra.mxu0 0.0
  %328 = vmatpush.msra.mxu0 %v307
  %329 = vmatpush.msra.mxu0 %v306
  %330 = vmatmul.f32.gmra.mxu0 %v309
  %v331 = vpop.f32.mrf.mxu0
  %v332 = vadd.f32 0.0, %v331
  %333 = vmatmul.f32.gmra.mxu0 %v312
  %v334 = vpop.f32.mrf.mxu0
  %v335 = vadd.f32 0.0, %v334
  %336 = vdwg.mxu0
  %v337 = vsub.f32 %v272, %v301
  %v338 = vsub.f32 %v275, %v304
  %v339 = vsub.f32 %v332, %v272
  %v340 = vsub.f32 %v335, %v275
  %v341 = vsub.f32 %v339, %v301
  %v342 = vsub.f32 %v340, %v304
  %v343 = vld [vmem:[%s6] sm:$0xff]
  %v344 = vld [vmem:[%s6 + $0x8] sm:$0xff]
  %v345 = vld [vmem:[%s7] sm:$0xff]
  %v346 = vld [vmem:[%s7 + $0x8] sm:$0xff]
  %v347 = vmul.f32 %v337, %v343
  %v348 = vmul.f32 %v338, %v344
  %v349 = vmul.f32 %v341, %v345
  %v350 = vmul.f32 %v342, %v346
  %v351 = vsub.f32 %v347, %v349
  %v352 = vsub.f32 %v348, %v350
  %v353 = vmul.f32 %v337, %v345
  %v354 = vmul.f32 %v338, %v346
  %v355 = vmul.f32 %v341, %v343
  %v356 = vmul.f32 %v342, %v344
  %v357 = vadd.f32 %v353, %v355
  %v358 = vadd.f32 %v354, %v356
  %359 = vmatpush.msra.mxu0 0.0
  %360 = vmatpush.msra.mxu0 0.0
  %361 = vmatpush.msra.mxu0 0.0
  %362 = vmatpush.msra.mxu0 0.0
  %363 = vmatpush.msra.mxu0 0.0
  %364 = vmatpush.msra.mxu0 0.0
  %365 = vmatpush.msra.mxu0 0.0
  %366 = vmatpush.msra.mxu0 0.0
  %367 = vmatpush.msra.mxu0 0.0
  %368 = vmatpush.msra.mxu0 0.0
  %369 = vmatpush.msra.mxu0 0.0
  %370 = vmatpush.msra.mxu0 0.0
  %371 = vmatpush.msra.mxu0 0.0
  %372 = vmatpush.msra.mxu0 0.0
  %373 = vmatpush.msra.mxu0 %v352
  %374 = vmatpush.msra.mxu0 %v351
  %375 = vmatmul.f32.gmra.mxu0 %v249
  %v376 = vpop.f32.mrf.mxu0
  %v377 = vadd.f32 0.0, %v376
  %378 = vmatmul.f32.gmra.mxu0 %v252
  %v379 = vpop.f32.mrf.mxu0
  %v380 = vadd.f32 0.0, %v379
  %381 = vdwg.mxu0
  %382 = vmatpush.msra.mxu0 0.0
  %383 = vmatpush.msra.mxu0 0.0
  %384 = vmatpush.msra.mxu0 0.0
  %385 = vmatpush.msra.mxu0 0.0
  %386 = vmatpush.msra.mxu0 0.0
  %387 = vmatpush.msra.mxu0 0.0
  %388 = vmatpush.msra.mxu0 0.0
  %389 = vmatpush.msra.mxu0 0.0
  %390 = vmatpush.msra.mxu0 0.0
  %391 = vmatpush.msra.mxu0 0.0
  %392 = vmatpush.msra.mxu0 0.0
  %393 = vmatpush.msra.mxu0 0.0
  %394 = vmatpush.msra.mxu0 0.0
  %395 = vmatpush.msra.mxu0 0.0
  %396 = vmatpush.msra.mxu0 %v358
  %397 = vmatpush.msra.mxu0 %v357
  %398 = vmatmul.f32.gmra.mxu0 %v278
  %v399 = vpop.f32.mrf.mxu0
  %v400 = vadd.f32 0.0, %v399
  %401 = vmatmul.f32.gmra.mxu0 %v281
  %v402 = vpop.f32.mrf.mxu0
  %v403 = vadd.f32 0.0, %v402
  %404 = vdwg.mxu0
  %v405 = vadd.f32 %v351, %v357
  %v406 = vadd.f32 %v352, %v358
  %v408 = vsel %vm79, %v37, 0
  %v411 = vsel %vm79, %v38, 0
  %413 = vmatpush.msra.mxu0 0.0
  %414 = vmatpush.msra.mxu0 0.0
  %415 = vmatpush.msra.mxu0 0.0
  %416 = vmatpush.msra.mxu0 0.0
  %417 = vmatpush.msra.mxu0 0.0
  %418 = vmatpush.msra.mxu0 0.0
  %419 = vmatpush.msra.mxu0 0.0
  %420 = vmatpush.msra.mxu0 0.0
  %421 = vmatpush.msra.mxu0 0.0
  %422 = vmatpush.msra.mxu0 0.0
  %423 = vmatpush.msra.mxu0 0.0
  %424 = vmatpush.msra.mxu0 0.0
  %425 = vmatpush.msra.mxu0 0.0
  %426 = vmatpush.msra.mxu0 0.0
  %427 = vmatpush.msra.mxu0 %v406
  %428 = vmatpush.msra.mxu0 %v405
  %429 = vmatmul.f32.gmra.mxu0 %v408
  %v430 = vpop.f32.mrf.mxu0
  %v431 = vadd.f32 0.0, %v430
  %432 = vmatmul.f32.gmra.mxu0 %v411
  %v433 = vpop.f32.mrf.mxu0
  %v434 = vadd.f32 0.0, %v433
  %435 = vdwg.mxu0
  %v436 = vadd.f32 %v377, %v400
  %v437 = vadd.f32 %v380, %v403
  %v438 = vsub.f32 %v431, %v377
  %v439 = vsub.f32 %v434, %v380
  %v440 = vadd.f32 %v438, %v400
  %v441 = vadd.f32 %v439, %v403
  %442 = vst.msk [vmem:[#allocation4] sm:$0xff] %vm79, %v436
  %443 = vst.msk [vmem:[#allocation4 + $0x8] sm:$0xff] %vm79, %v437
  %444 = vst.msk [vmem:[#allocation5] sm:$0xff] %vm79, %v440
  %445 = vst.msk [vmem:[#allocation5 + $0x8] sm:$0xff] %vm79, %v441
  %448 = vrot.lane.b32.xlu0 %v436, 112
  %v449 = vpop.permute.xlu0 %448
  %450 = vrot.lane.b32.xlu0 %v437, 112
  %v451 = vpop.permute.xlu0 %450
  %454 = vst.msk [vmem:[#allocation4 + $0x10] sm:$0xff] %vm79, %v449
  %455 = vst.msk [vmem:[#allocation4 + $0x18] sm:$0xff] %vm79, %v451
  %458 = vrot.lane.b32.xlu0 %v440, 112
  %v459 = vpop.permute.xlu0 %458
  %460 = vrot.lane.b32.xlu0 %v441, 112
  %v461 = vpop.permute.xlu0 %460
  %464 = vst.msk [vmem:[#allocation5 + $0x10] sm:$0xff] %vm79, %v459
  %465 = vst.msk [vmem:[#allocation5 + $0x18] sm:$0xff] %vm79, %v461
  %v466 = vld [vmem:[#allocation4] sm:$0xff]
  %v467 = vld [vmem:[#allocation4 + $0x8] sm:$0xff]
  %v468 = vld [vmem:[#allocation4 + $0x10] sm:$0xff]
  %v469 = vld [vmem:[#allocation4 + $0x18] sm:$0xff]
  %v470 = vld [vmem:[#allocation5] sm:$0xff]
  %v471 = vld [vmem:[#allocation5 + $0x8] sm:$0xff]
  %v472 = vld [vmem:[#allocation5 + $0x10] sm:$0xff]
  %v473 = vld [vmem:[#allocation5 + $0x18] sm:$0xff]
  %v475 = vsel %vm79, %v466, 0
  %v478 = vsel %vm79, %v467, 0
  %v481 = vsel %vm79, %v468, 0
  %v484 = vsel %vm79, %v469, 0
  %486 = vmatpush.msra.mxu0 0.0
  %487 = vmatpush.msra.mxu0 0.0
  %488 = vmatpush.msra.mxu0 0.0
  %489 = vmatpush.msra.mxu0 0.0
  %490 = vmatpush.msra.mxu0 0.0
  %491 = vmatpush.msra.mxu0 0.0
  %492 = vmatpush.msra.mxu0 0.0
  %493 = vmatpush.msra.mxu0 0.0
  %494 = vmatpush.msra.mxu0 0.0
  %495 = vmatpush.msra.mxu0 0.0
  %496 = vmatpush.msra.mxu0 0.0
  %497 = vmatpush.msra.mxu0 0.0
  %498 = vmatpush.msra.mxu0 0.0
  %499 = vmatpush.msra.mxu0 0.0
  %500 = vmatpush.msra.mxu0 %v32
  %501 = vmatpush.msra.mxu0 %v31
  %502 = vmatmul.f32.gmra.mxu0 %v475
  %v503 = vpop.f32.mrf.mxu0
  %v504 = vadd.f32 0.0, %v503
  %505 = vmatmul.f32.gmra.mxu0 %v478
  %v506 = vpop.f32.mrf.mxu0
  %v507 = vadd.f32 0.0, %v506
  %508 = vmatmul.f32.gmra.mxu0 %v481
  %v509 = vpop.f32.mrf.mxu0
  %v510 = vadd.f32 0.0, %v509
  %511 = vmatmul.f32.gmra.mxu0 %v484
  %v512 = vpop.f32.mrf.mxu0
  %v513 = vadd.f32 0.0, %v512
  %514 = vdwg.mxu0
  %v516 = vsel %vm79, %v470, 0
  %v519 = vsel %vm79, %v471, 0
  %v522 = vsel %vm79, %v472, 0
  %v525 = vsel %vm79, %v473, 0
  %527 = vmatpush.msra.mxu0 0.0
  %528 = vmatpush.msra.mxu0 0.0
  %529 = vmatpush.msra.mxu0 0.0
  %530 = vmatpush.msra.mxu0 0.0
  %531 = vmatpush.msra.mxu0 0.0
  %532 = vmatpush.msra.mxu0 0.0
  %533 = vmatpush.msra.mxu0 0.0
  %534 = vmatpush.msra.mxu0 0.0
  %535 = vmatpush.msra.mxu0 0.0
  %536 = vmatpush.msra.mxu0 0.0
  %537 = vmatpush.msra.mxu0 0.0
  %538 = vmatpush.msra.mxu0 0.0
  %539 = vmatpush.msra.mxu0 0.0
  %540 = vmatpush.msra.mxu0 0.0
  %541 = vmatpush.msra.mxu0 %v34
  %542 = vmatpush.msra.mxu0 %v33
  %543 = vmatmul.f32.gmra.mxu0 %v516
  %v544 = vpop.f32.mrf.mxu0
  %v545 = vadd.f32 0.0, %v544
  %546 = vmatmul.f32.gmra.mxu0 %v519
  %v547 = vpop.f32.mrf.mxu0
  %v548 = vadd.f32 0.0, %v547
  %549 = vmatmul.f32.gmra.mxu0 %v522
  %v550 = vpop.f32.mrf.mxu0
  %v551 = vadd.f32 0.0, %v550
  %552 = vmatmul.f32.gmra.mxu0 %v525
  %v553 = vpop.f32.mrf.mxu0
  %v554 = vadd.f32 0.0, %v553
  %555 = vdwg.mxu0
  %v556 = vadd.f32 %v466, %v470
  %v557 = vadd.f32 %v467, %v471
  %v558 = vadd.f32 %v468, %v472
  %v559 = vadd.f32 %v469, %v473
  %v561 = vsel %vm79, %v556, 0
  %v564 = vsel %vm79, %v557, 0
  %v567 = vsel %vm79, %v558, 0
  %v570 = vsel %vm79, %v559, 0
  %572 = vmatpush.msra.mxu0 0.0
  %573 = vmatpush.msra.mxu0 0.0
  %574 = vmatpush.msra.mxu0 0.0
  %575 = vmatpush.msra.mxu0 0.0
  %576 = vmatpush.msra.mxu0 0.0
  %577 = vmatpush.msra.mxu0 0.0
  %578 = vmatpush.msra.mxu0 0.0
  %579 = vmatpush.msra.mxu0 0.0
  %580 = vmatpush.msra.mxu0 0.0
  %581 = vmatpush.msra.mxu0 0.0
  %582 = vmatpush.msra.mxu0 0.0
  %583 = vmatpush.msra.mxu0 0.0
  %584 = vmatpush.msra.mxu0 0.0
  %585 = vmatpush.msra.mxu0 0.0
  %586 = vmatpush.msra.mxu0 %v38
  %587 = vmatpush.msra.mxu0 %v37
  %588 = vmatmul.f32.gmra.mxu0 %v561
  %v589 = vpop.f32.mrf.mxu0
  %v590 = vadd.f32 0.0, %v589
  %591 = vmatmul.f32.gmra.mxu0 %v564
  %v592 = vpop.f32.mrf.mxu0
  %v593 = vadd.f32 0.0, %v592
  %594 = vmatmul.f32.gmra.mxu0 %v567
  %v595 = vpop.f32.mrf.mxu0
  %v596 = vadd.f32 0.0, %v595
  %597 = vmatmul.f32.gmra.mxu0 %v570
  %v598 = vpop.f32.mrf.mxu0
  %v599 = vadd.f32 0.0, %v598
  %600 = vdwg.mxu0
  %v601 = vadd.f32 %v504, %v545
  %v602 = vadd.f32 %v507, %v548
  %v603 = vadd.f32 %v510, %v551
  %v604 = vadd.f32 %v513, %v554
  %v605 = vsub.f32 %v590, %v504
  %v606 = vsub.f32 %v593, %v507
  %v607 = vsub.f32 %v596, %v510
  %v608 = vsub.f32 %v599, %v513
  %v609 = vadd.f32 %v605, %v545
  %v610 = vadd.f32 %v606, %v548
  %v611 = vadd.f32 %v607, %v551
  %v612 = vadd.f32 %v608, %v554
  %613 = vst.msk [vmem:[%s8] sm:$0xff] %vm79, %v601
  %614 = vst.msk [vmem:[%s8 + $0x8] sm:$0xff] %vm79, %v602
  %615 = vst.msk [vmem:[%s8 + $0x10] sm:$0xff] %vm79, %v603
  %616 = vst.msk [vmem:[%s8 + $0x18] sm:$0xff] %vm79, %v604
  %617 = vst.msk [vmem:[%s9] sm:$0xff] %vm79, %v609
  %618 = vst.msk [vmem:[%s9 + $0x8] sm:$0xff] %vm79, %v610
  %619 = vst.msk [vmem:[%s9 + $0x10] sm:$0xff] %vm79, %v611
  %620 = vst.msk [vmem:[%s9 + $0x18] sm:$0xff] %vm79, %v612
  // Predicated region
  $region34: #{tpu_custom_call.1} parent=0 // pred_check
    _
  $region35: #{tpu_custom_call.1} parent=0 // pred_check_branch
    %622 = sbr.rel (0) target = $region37
  $region36: #{tpu_custom_call.1} parent=0 // pred_region
    _
  $region37: #{tpu_custom_call.1} parent=0 // pred_fallthru
    _
  // Predicated region
  $region38: #{tpu_custom_call.1} parent=0 // pred_check
    _
  $region39: #{tpu_custom_call.1} parent=0 // pred_check_branch
    %624 = sbr.rel (0) target = $region41
  $region40: #{tpu_custom_call.1} parent=0 // pred_region
    _
  $region41: #{tpu_custom_call.1} parent=0 // pred_fallthru
    _
  // Predicated region
  $region42: #{tpu_custom_call.1} parent=0 // pred_check
    _
  $region43: #{tpu_custom_call.1} parent=0 // pred_check_branch
    %626 = sbr.rel (0) target = $region45
  $region44: #{tpu_custom_call.1} parent=0 // pred_region
    _
  $region45: #{tpu_custom_call.1} parent=0 // pred_fallthru
    _
  // Predicated region
  $region46: #{tpu_custom_call.1} parent=0 // pred_check
    _
  $region47: #{tpu_custom_call.1} parent=0 // pred_check_branch
    %628 = sbr.rel (0) target = $region49
  $region48: #{tpu_custom_call.1} parent=0 // pred_region
    _
  $region49: #{tpu_custom_call.1} parent=0 // pred_fallthru
    _

</llo_original>
